<compile_context>
chip_gen: v5e
topology: v5e:2x2
jax: 0.10.0
libtpu: 0.0.40
codegen_flags: <defaults>
</compile_context>

<pallas_src>
import jax
import jax.numpy as jnp
from jax.experimental import pallas as pl
from jax.experimental.pallas import tpu as pltpu

KERNEL_SET = (2, 3, 6, 7)
DILATION = 2
# Maximum "same-length" padding across branches; every branch's taps index into a
# slab padded by P_MAX on both sides of the length axis.
P_MAX = (max(KERNEL_SET) - 1) * DILATION // 2      # = 6
N_TAPS = 2 * P_MAX + 1                             # 13 distinct tap offsets (0..12)


def _dilated_inception_kernel(x_ref, w_ref, b_ref, o_ref, xpad_ref):
    # x_ref   : (Bt, Cin, L)         f32  raw NCL input block (no wrapper pad/cast)
    # w_ref   : (N_TAPS, Cout, Cin)  bf16 fused tap weights (zero where branch has no tap)
    # b_ref   : (Cout, 1)            f32  fused bias of all four branches
    # o_ref   : (Bt, Cout, L)        f32  NCL output == torch.cat([conv_i(x)], dim=1)
    # xpad_ref: (Bt, Cin, L+2*P_MAX) bf16 scratch: halo-padded, bf16-cast input slab
    b_tile, cin, L = x_ref.shape

    # ---- in-kernel halo pad + bf16 cast (replaces the old wrapper pad/cast pass) ----
    zeros_halo = jnp.zeros((b_tile, cin, P_MAX), xpad_ref.dtype)
    xpad_ref[:, :, :P_MAX] = zeros_halo                 # leading halo
    xpad_ref[:, :, P_MAX + L:] = zeros_halo             # trailing halo
    xpad_ref[:, :, P_MAX:P_MAX + L] = x_ref[...].astype(xpad_ref.dtype)  # one payload store

    # Bias load hoisted out of the batch loop; the (Cout,1)->(Cout,L) broadcast inside
    # the loop is a single cheap lane-broadcast per runtime iteration (the fori_loop
    # body is traced once, so there is no trace-time duplication).
    bias = b_ref[...]                                   # (Cout, 1) f32

    def body(b, carry):
        xb = xpad_ref[b]                                # (Cin, Lp) bf16, dynamic index
        # Single fp32 accumulation chain over the 13 fused taps (one accumulator =>
        # in-place MRB accumulation on v7x); initialised by tap 0 instead of zeros+add.
        acc = jnp.dot(w_ref[0], xb[:, 0:L], preferred_element_type=jnp.float32)
        for s in range(1, N_TAPS):                      # static unroll of 13 taps only
            acc = acc + jnp.dot(w_ref[s], xb[:, s:s + L],
                                preferred_element_type=jnp.float32)
        o_ref[b] = (acc + bias).astype(o_ref.dtype)
        return carry

    jax.lax.fori_loop(0, b_tile, body, 0, unroll=2 if b_tile > 1 else 1)


def _pack_params(weights, biases):
    """weights[i]: (Cb, Cin, K_i) in nn.Conv1d layout; biases[i]: (Cb,).
    Returns fused (N_TAPS, 4*Cb, Cin) bf16 weights and (4*Cb, 1) f32 bias."""
    cb, cin, _ = weights[0].shape
    cout = cb * len(KERNEL_SET)
    w_fused = jnp.zeros((N_TAPS, cout, cin), jnp.float32)
    for i, (kern, w) in enumerate(zip(KERNEL_SET, weights)):
        pad = (kern - 1) * DILATION // 2
        offset = P_MAX - pad                            # where this branch's taps start
        for k in range(kern):
            s = offset + k * DILATION
            w_fused = w_fused.at[s, i * cb:(i + 1) * cb, :].set(w[:, :, k])
    b_fused = jnp.concatenate(list(biases)).reshape(cout, 1).astype(jnp.float32)
    return w_fused.astype(jnp.bfloat16), b_fused


def _vmem_budget():
    """(per-step block budget, vmem_limit_bytes) tuned per generation."""
    kind = ""
    try:
        kind = jax.devices()[0].device_kind.lower()
    except Exception:
        pass
    if any(t in kind for t in ("v4", "v5", "v6")):      # 128 MiB physical VMEM, 1 TC
        return 80 * 1024 * 1024, 100 * 1024 * 1024
    # v7x / unknown: 64 MiB physical VMEM, 2 TensorCores -> stay conservative.
    return 28 * 1024 * 1024, 48 * 1024 * 1024


def _pick_batch_tile(n, cin, cout, L, lp, budget_bytes):
    """Largest divisor of n whose per-step working set fits the budget, keeping
    >= 2 grid steps when possible (pipelining + v7x's 2 TensorCores)."""
    def step_bytes(bt):
        return (2 * bt * cin * L * 4          # double-buffered f32 input block
                + 2 * bt * cout * L * 4       # double-buffered f32 output block
                + bt * cin * lp * 2           # bf16 padded-slab scratch
                + 2 * (N_TAPS * cout * cin * 2 + cout * 4))   # weights + bias
    min_steps = 2 if n >= 2 else 1
    best = 1
    for bt in range(1, n + 1):
        if n % bt or n // bt < min_steps:
            continue
        if step_bytes(bt) > budget_bytes:
            continue
        best = bt
    return best


def dilated_inception(x_ncl, weights, biases, *, batch_tile=None):
    """x_ncl: (N, Cin, L) f32.  weights[i]: (Cb, Cin, K_i) (nn.Conv1d layout),
    biases[i]: (Cb,).  Returns (N, 4*Cb, L) f32, matching the PyTorch module."""
    n, cin, L = x_ncl.shape
    cb = weights[0].shape[0]
    cout = cb * len(KERNEL_SET)
    lp = L + 2 * P_MAX

    w_fused, b_fused = _pack_params(weights, biases)

    block_budget, vmem_limit = _vmem_budget()
    if batch_tile is None:
        batch_tile = _pick_batch_tile(n, cin, cout, L, lp, block_budget)
    assert n % batch_tile == 0
    grid = (n // batch_tile,)

    # TODO(synk): for very long sequences add a length-tile grid axis with a P_MAX halo
    # (blocks currently scale with full L and would hit v7x's 64 MiB VMEM first).

    flops = 2 * n * cout * L * cin * N_TAPS
    bytes_accessed = (n * cin * L * 4 + n * cout * L * 4
                      + N_TAPS * cout * cin * 2 + cout * 4)

    return pl.pallas_call(
        _dilated_inception_kernel,
        out_shape=jax.ShapeDtypeStruct((n, cout, L), x_ncl.dtype),
        grid_spec=pltpu.PrefetchScalarGridSpec(
            num_scalar_prefetch=0,
            grid=grid,
            in_specs=[
                pl.BlockSpec((batch_tile, cin, L), lambda i: (i, 0, 0)),
                pl.BlockSpec((N_TAPS, cout, cin), lambda i: (0, 0, 0)),
                pl.BlockSpec((cout, 1), lambda i: (0, 0)),
            ],
            out_specs=pl.BlockSpec((batch_tile, cout, L), lambda i: (i, 0, 0)),
            scratch_shapes=[pltpu.VMEM((batch_tile, cin, lp), jnp.bfloat16)],
        ),
        compiler_params=pltpu.CompilerParams(
            dimension_semantics=("parallel",),
            vmem_limit_bytes=vmem_limit,
        ),
        cost_estimate=pl.CostEstimate(flops=flops, transcendentals=0,
                                      bytes_accessed=bytes_accessed),
    )(x_ncl, w_fused, b_fused)


def _reference(x_ncl, weights, biases):
    """Pure-JAX reference with lax.conv_general_dilated (mirrors nn.Conv1d)."""
    outs = []
    for kern, w, bias in zip(KERNEL_SET, weights, biases):
        pad = (kern - 1) * DILATION // 2
        y = jax.lax.conv_general_dilated(
            x_ncl, w, window_strides=(1,), padding=[(pad, pad)],
            rhs_dilation=(DILATION,),
            dimension_numbers=("NCH", "OIH", "NCH"))
        outs.append(y + bias.reshape(1, -1, 1))
    return jnp.concatenate(outs, axis=1)


if __name__ == "__main__":
    N, CIN, COUT, L = 2, 8, 16, 16
    cb = COUT // len(KERNEL_SET)

    key = jax.random.PRNGKey(0)
    keys = jax.random.split(key, 1 + 2 * len(KERNEL_SET))
    x = jax.random.normal(keys[0], (N, CIN, L), jnp.float32)

    # Deterministic init mimicking nn.Conv1d default: U(-1/sqrt(fan_in), 1/sqrt(fan_in))
    weights, biases = [], []
    for i, kern in enumerate(KERNEL_SET):
        bound = 1.0 / (CIN * kern) ** 0.5
        w = jax.random.uniform(keys[1 + 2 * i], (cb, CIN, kern), jnp.float32, -bound, bound)
        b = jax.random.uniform(keys[2 + 2 * i], (cb,), jnp.float32, -bound, bound)
        weights.append(w)
        biases.append(b)

    out = jax.block_until_ready(dilated_inception(x, weights, biases))

    # Reference on bf16-quantized inputs (the kernel feeds the MXU bf16 operands with
    # fp32 accumulation), so the comparison stays tight.
    q = lambda a: a.astype(jnp.bfloat16).astype(jnp.float32)
    ref = _reference(q(x), [q(w) for w in weights], biases)

    assert out.shape == (N, COUT, L), out.shape
    err = float(jnp.max(jnp.abs(out - ref)))
    assert jnp.allclose(out, ref, atol=1e-3, rtol=1e-3), err
    print("KERNEL_OK")
</pallas_src>

<mosaic_0001>
module attributes {stable_mosaic.version = 11 : i64} {
  func.func @_dilated_inception_kernel(%arg0: i32, %arg1: memref<1x8x16xf32, #tpu.memory_space<vmem>>, %arg2: memref<13x16x8xbf16, #tpu.memory_space<vmem>>, %arg3: memref<16x1xf32, #tpu.memory_space<vmem>>, %arg4: memref<1x16x16xf32, #tpu.memory_space<vmem>>, %arg5: memref<1x8x28xbf16, #tpu.memory_space<vmem>>) attributes {dimension_semantics = [#tpu.dimension_semantics<parallel>], iteration_bounds = array<i64: 2>, scalar_prefetch = 0 : i64, scratch_operands = 1 : i64, tpu.core_type = #tpu.core_type<tc>, window_params = [{transform_indices = @transform_0, window_bounds = array<i64: 1, 8, 16>}, {pipeline_mode = #tpu.pipeline_mode<synchronous>, transform_indices = @transform_1, window_bounds = array<i64: 13, 16, 8>}, {pipeline_mode = #tpu.pipeline_mode<synchronous>, transform_indices = @transform_2, window_bounds = array<i64: 16, 1>}, {transform_indices = @transform_3, window_bounds = array<i64: 1, 16, 16>}]} {
    %cst = arith.constant 0.000000e+00 : bf16
    %0 = vector.broadcast %cst : bf16 to vector<1x8x6xbf16>
    %c0 = arith.constant 0 : index
    %c0_0 = arith.constant 0 : index
    %c0_1 = arith.constant 0 : index
    %1 = vector.load %arg5[%c0, %c0_0, %c0_1] : memref<1x8x28xbf16, #tpu.memory_space<vmem>>, vector<1x8x6xbf16>
    tpu.vector_store %arg5[%c0, %c0_0, %c0_1], %0 {strides = array<i32>} : memref<1x8x28xbf16, #tpu.memory_space<vmem>>, vector<1x8x6xbf16>,
    %c0_2 = arith.constant 0 : index
    %c0_3 = arith.constant 0 : index
    %c22 = arith.constant 22 : index
    %2 = vector.load %arg5[%c0_2, %c0_3, %c22] : memref<1x8x28xbf16, #tpu.memory_space<vmem>>, vector<1x8x6xbf16>
    tpu.vector_store %arg5[%c0_2, %c0_3, %c22], %0 {strides = array<i32>} : memref<1x8x28xbf16, #tpu.memory_space<vmem>>, vector<1x8x6xbf16>,
    %c0_4 = arith.constant 0 : index
    %c0_5 = arith.constant 0 : index
    %c0_6 = arith.constant 0 : index
    %3 = vector.load %arg1[%c0_4, %c0_5, %c0_6] : memref<1x8x16xf32, #tpu.memory_space<vmem>>, vector<1x8x16xf32>
    %4 = arith.truncf %3 : vector<1x8x16xf32> to vector<1x8x16xbf16>
    %c0_7 = arith.constant 0 : index
    %c0_8 = arith.constant 0 : index
    %c6 = arith.constant 6 : index
    %5 = vector.load %arg5[%c0_7, %c0_8, %c6] : memref<1x8x28xbf16, #tpu.memory_space<vmem>>, vector<1x8x16xbf16>
    tpu.vector_store %arg5[%c0_7, %c0_8, %c6], %4 {strides = array<i32>} : memref<1x8x28xbf16, #tpu.memory_space<vmem>>, vector<1x8x16xbf16>,
    %c0_9 = arith.constant 0 : index
    %c0_10 = arith.constant 0 : index
    %6 = vector.load %arg3[%c0_9, %c0_10] : memref<16x1xf32, #tpu.memory_space<vmem>>, vector<16x1xf32>
    %c0_i32 = arith.constant 0 : i32
    %7 = arith.index_cast %c0_i32 : i32 to index
    %c0_11 = arith.constant 0 : index
    %c0_12 = arith.constant 0 : index
    %8 = vector.load %arg5[%7, %c0_11, %c0_12] : memref<1x8x28xbf16, #tpu.memory_space<vmem>>, vector<1x8x28xbf16>
    %9 = vector.shape_cast %8 : vector<1x8x28xbf16> to vector<8x28xbf16>
    %c0_13 = arith.constant 0 : index
    %c0_14 = arith.constant 0 : index
    %c0_15 = arith.constant 0 : index
    %10 = vector.load %arg2[%c0_13, %c0_14, %c0_15] : memref<13x16x8xbf16, #tpu.memory_space<vmem>>, vector<1x16x8xbf16>
    %11 = vector.shape_cast %10 : vector<1x16x8xbf16> to vector<16x8xbf16>
    %12 = vector.extract_strided_slice %9 {offsets = [0, 0], sizes = [8, 16], strides = [1, 1]} : vector<8x28xbf16> to vector<8x16xbf16>
    %cst_16 = arith.constant dense<0.000000e+00> : vector<16x16xf32>
    %13 = tpu.matmul %11, %12, %cst_16 {dimension_numbers = #tpu.dot_dimension_numbers<[1], [0], [0], [1], [0, 0, 1, 1], [], []>} : vector<16x8xbf16>, vector<8x16xbf16>, vector<16x16xf32> -> vector<16x16xf32>
    %c1 = arith.constant 1 : index
    %c0_17 = arith.constant 0 : index
    %c0_18 = arith.constant 0 : index
    %14 = vector.load %arg2[%c1, %c0_17, %c0_18] : memref<13x16x8xbf16, #tpu.memory_space<vmem>>, vector<1x16x8xbf16>
    %15 = vector.shape_cast %14 : vector<1x16x8xbf16> to vector<16x8xbf16>
    %16 = vector.extract_strided_slice %9 {offsets = [0, 1], sizes = [8, 16], strides = [1, 1]} : vector<8x28xbf16> to vector<8x16xbf16>
    %cst_19 = arith.constant dense<0.000000e+00> : vector<16x16xf32>
    %17 = tpu.matmul %15, %16, %cst_19 {dimension_numbers = #tpu.dot_dimension_numbers<[1], [0], [0], [1], [0, 0, 1, 1], [], []>} : vector<16x8xbf16>, vector<8x16xbf16>, vector<16x16xf32> -> vector<16x16xf32>
    %18 = arith.addf %13, %17 : vector<16x16xf32>
    %c2 = arith.constant 2 : index
    %c0_20 = arith.constant 0 : index
    %c0_21 = arith.constant 0 : index
    %19 = vector.load %arg2[%c2, %c0_20, %c0_21] : memref<13x16x8xbf16, #tpu.memory_space<vmem>>, vector<1x16x8xbf16>
    %20 = vector.shape_cast %19 : vector<1x16x8xbf16> to vector<16x8xbf16>
    %21 = vector.extract_strided_slice %9 {offsets = [0, 2], sizes = [8, 16], strides = [1, 1]} : vector<8x28xbf16> to vector<8x16xbf16>
    %cst_22 = arith.constant dense<0.000000e+00> : vector<16x16xf32>
    %22 = tpu.matmul %20, %21, %cst_22 {dimension_numbers = #tpu.dot_dimension_numbers<[1], [0], [0], [1], [0, 0, 1, 1], [], []>} : vector<16x8xbf16>, vector<8x16xbf16>, vector<16x16xf32> -> vector<16x16xf32>
    %23 = arith.addf %18, %22 : vector<16x16xf32>
    %c3 = arith.constant 3 : index
    %c0_23 = arith.constant 0 : index
    %c0_24 = arith.constant 0 : index
    %24 = vector.load %arg2[%c3, %c0_23, %c0_24] : memref<13x16x8xbf16, #tpu.memory_space<vmem>>, vector<1x16x8xbf16>
    %25 = vector.shape_cast %24 : vector<1x16x8xbf16> to vector<16x8xbf16>
    %26 = vector.extract_strided_slice %9 {offsets = [0, 3], sizes = [8, 16], strides = [1, 1]} : vector<8x28xbf16> to vector<8x16xbf16>
    %cst_25 = arith.constant dense<0.000000e+00> : vector<16x16xf32>
    %27 = tpu.matmul %25, %26, %cst_25 {dimension_numbers = #tpu.dot_dimension_numbers<[1], [0], [0], [1], [0, 0, 1, 1], [], []>} : vector<16x8xbf16>, vector<8x16xbf16>, vector<16x16xf32> -> vector<16x16xf32>
    %28 = arith.addf %23, %27 : vector<16x16xf32>
    %c4 = arith.constant 4 : index
    %c0_26 = arith.constant 0 : index
    %c0_27 = arith.constant 0 : index
    %29 = vector.load %arg2[%c4, %c0_26, %c0_27] : memref<13x16x8xbf16, #tpu.memory_space<vmem>>, vector<1x16x8xbf16>
    %30 = vector.shape_cast %29 : vector<1x16x8xbf16> to vector<16x8xbf16>
    %31 = vector.extract_strided_slice %9 {offsets = [0, 4], sizes = [8, 16], strides = [1, 1]} : vector<8x28xbf16> to vector<8x16xbf16>
    %cst_28 = arith.constant dense<0.000000e+00> : vector<16x16xf32>
    %32 = tpu.matmul %30, %31, %cst_28 {dimension_numbers = #tpu.dot_dimension_numbers<[1], [0], [0], [1], [0, 0, 1, 1], [], []>} : vector<16x8xbf16>, vector<8x16xbf16>, vector<16x16xf32> -> vector<16x16xf32>
    %33 = arith.addf %28, %32 : vector<16x16xf32>
    %c5 = arith.constant 5 : index
    %c0_29 = arith.constant 0 : index
    %c0_30 = arith.constant 0 : index
    %34 = vector.load %arg2[%c5, %c0_29, %c0_30] : memref<13x16x8xbf16, #tpu.memory_space<vmem>>, vector<1x16x8xbf16>
    %35 = vector.shape_cast %34 : vector<1x16x8xbf16> to vector<16x8xbf16>
    %36 = vector.extract_strided_slice %9 {offsets = [0, 5], sizes = [8, 16], strides = [1, 1]} : vector<8x28xbf16> to vector<8x16xbf16>
    %cst_31 = arith.constant dense<0.000000e+00> : vector<16x16xf32>
    %37 = tpu.matmul %35, %36, %cst_31 {dimension_numbers = #tpu.dot_dimension_numbers<[1], [0], [0], [1], [0, 0, 1, 1], [], []>} : vector<16x8xbf16>, vector<8x16xbf16>, vector<16x16xf32> -> vector<16x16xf32>
    %38 = arith.addf %33, %37 : vector<16x16xf32>
    %c6_32 = arith.constant 6 : index
    %c0_33 = arith.constant 0 : index
    %c0_34 = arith.constant 0 : index
    %39 = vector.load %arg2[%c6_32, %c0_33, %c0_34] : memref<13x16x8xbf16, #tpu.memory_space<vmem>>, vector<1x16x8xbf16>
    %40 = vector.shape_cast %39 : vector<1x16x8xbf16> to vector<16x8xbf16>
    %41 = vector.extract_strided_slice %9 {offsets = [0, 6], sizes = [8, 16], strides = [1, 1]} : vector<8x28xbf16> to vector<8x16xbf16>
    %cst_35 = arith.constant dense<0.000000e+00> : vector<16x16xf32>
    %42 = tpu.matmul %40, %41, %cst_35 {dimension_numbers = #tpu.dot_dimension_numbers<[1], [0], [0], [1], [0, 0, 1, 1], [], []>} : vector<16x8xbf16>, vector<8x16xbf16>, vector<16x16xf32> -> vector<16x16xf32>
    %43 = arith.addf %38, %42 : vector<16x16xf32>
    %c7 = arith.constant 7 : index
    %c0_36 = arith.constant 0 : index
    %c0_37 = arith.constant 0 : index
    %44 = vector.load %arg2[%c7, %c0_36, %c0_37] : memref<13x16x8xbf16, #tpu.memory_space<vmem>>, vector<1x16x8xbf16>
    %45 = vector.shape_cast %44 : vector<1x16x8xbf16> to vector<16x8xbf16>
    %46 = vector.extract_strided_slice %9 {offsets = [0, 7], sizes = [8, 16], strides = [1, 1]} : vector<8x28xbf16> to vector<8x16xbf16>
    %cst_38 = arith.constant dense<0.000000e+00> : vector<16x16xf32>
    %47 = tpu.matmul %45, %46, %cst_38 {dimension_numbers = #tpu.dot_dimension_numbers<[1], [0], [0], [1], [0, 0, 1, 1], [], []>} : vector<16x8xbf16>, vector<8x16xbf16>, vector<16x16xf32> -> vector<16x16xf32>
    %48 = arith.addf %43, %47 : vector<16x16xf32>
    %c8 = arith.constant 8 : index
    %c0_39 = arith.constant 0 : index
    %c0_40 = arith.constant 0 : index
    %49 = vector.load %arg2[%c8, %c0_39, %c0_40] : memref<13x16x8xbf16, #tpu.memory_space<vmem>>, vector<1x16x8xbf16>
    %50 = vector.shape_cast %49 : vector<1x16x8xbf16> to vector<16x8xbf16>
    %51 = vector.extract_strided_slice %9 {offsets = [0, 8], sizes = [8, 16], strides = [1, 1]} : vector<8x28xbf16> to vector<8x16xbf16>
    %cst_41 = arith.constant dense<0.000000e+00> : vector<16x16xf32>
    %52 = tpu.matmul %50, %51, %cst_41 {dimension_numbers = #tpu.dot_dimension_numbers<[1], [0], [0], [1], [0, 0, 1, 1], [], []>} : vector<16x8xbf16>, vector<8x16xbf16>, vector<16x16xf32> -> vector<16x16xf32>
    %53 = arith.addf %48, %52 : vector<16x16xf32>
    %c9 = arith.constant 9 : index
    %c0_42 = arith.constant 0 : index
    %c0_43 = arith.constant 0 : index
    %54 = vector.load %arg2[%c9, %c0_42, %c0_43] : memref<13x16x8xbf16, #tpu.memory_space<vmem>>, vector<1x16x8xbf16>
    %55 = vector.shape_cast %54 : vector<1x16x8xbf16> to vector<16x8xbf16>
    %56 = vector.extract_strided_slice %9 {offsets = [0, 9], sizes = [8, 16], strides = [1, 1]} : vector<8x28xbf16> to vector<8x16xbf16>
    %cst_44 = arith.constant dense<0.000000e+00> : vector<16x16xf32>
    %57 = tpu.matmul %55, %56, %cst_44 {dimension_numbers = #tpu.dot_dimension_numbers<[1], [0], [0], [1], [0, 0, 1, 1], [], []>} : vector<16x8xbf16>, vector<8x16xbf16>, vector<16x16xf32> -> vector<16x16xf32>
    %58 = arith.addf %53, %57 : vector<16x16xf32>
    %c10 = arith.constant 10 : index
    %c0_45 = arith.constant 0 : index
    %c0_46 = arith.constant 0 : index
    %59 = vector.load %arg2[%c10, %c0_45, %c0_46] : memref<13x16x8xbf16, #tpu.memory_space<vmem>>, vector<1x16x8xbf16>
    %60 = vector.shape_cast %59 : vector<1x16x8xbf16> to vector<16x8xbf16>
    %61 = vector.extract_strided_slice %9 {offsets = [0, 10], sizes = [8, 16], strides = [1, 1]} : vector<8x28xbf16> to vector<8x16xbf16>
    %cst_47 = arith.constant dense<0.000000e+00> : vector<16x16xf32>
    %62 = tpu.matmul %60, %61, %cst_47 {dimension_numbers = #tpu.dot_dimension_numbers<[1], [0], [0], [1], [0, 0, 1, 1], [], []>} : vector<16x8xbf16>, vector<8x16xbf16>, vector<16x16xf32> -> vector<16x16xf32>
    %63 = arith.addf %58, %62 : vector<16x16xf32>
    %c11 = arith.constant 11 : index
    %c0_48 = arith.constant 0 : index
    %c0_49 = arith.constant 0 : index
    %64 = vector.load %arg2[%c11, %c0_48, %c0_49] : memref<13x16x8xbf16, #tpu.memory_space<vmem>>, vector<1x16x8xbf16>
    %65 = vector.shape_cast %64 : vector<1x16x8xbf16> to vector<16x8xbf16>
    %66 = vector.extract_strided_slice %9 {offsets = [0, 11], sizes = [8, 16], strides = [1, 1]} : vector<8x28xbf16> to vector<8x16xbf16>
    %cst_50 = arith.constant dense<0.000000e+00> : vector<16x16xf32>
    %67 = tpu.matmul %65, %66, %cst_50 {dimension_numbers = #tpu.dot_dimension_numbers<[1], [0], [0], [1], [0, 0, 1, 1], [], []>} : vector<16x8xbf16>, vector<8x16xbf16>, vector<16x16xf32> -> vector<16x16xf32>
    %68 = arith.addf %63, %67 : vector<16x16xf32>
    %c12 = arith.constant 12 : index
    %c0_51 = arith.constant 0 : index
    %c0_52 = arith.constant 0 : index
    %69 = vector.load %arg2[%c12, %c0_51, %c0_52] : memref<13x16x8xbf16, #tpu.memory_space<vmem>>, vector<1x16x8xbf16>
    %70 = vector.shape_cast %69 : vector<1x16x8xbf16> to vector<16x8xbf16>
    %71 = vector.extract_strided_slice %9 {offsets = [0, 12], sizes = [8, 16], strides = [1, 1]} : vector<8x28xbf16> to vector<8x16xbf16>
    %cst_53 = arith.constant dense<0.000000e+00> : vector<16x16xf32>
    %72 = tpu.matmul %70, %71, %cst_53 {dimension_numbers = #tpu.dot_dimension_numbers<[1], [0], [0], [1], [0, 0, 1, 1], [], []>} : vector<16x8xbf16>, vector<8x16xbf16>, vector<16x16xf32> -> vector<16x16xf32>
    %73 = arith.addf %68, %72 : vector<16x16xf32>
    %74 = vector.broadcast %6 : vector<16x1xf32> to vector<16x16xf32>
    %75 = arith.addf %73, %74 : vector<16x16xf32>
    %76 = arith.index_cast %c0_i32 : i32 to index
    %c0_54 = arith.constant 0 : index
    %c0_55 = arith.constant 0 : index
    %77 = vector.load %arg4[%76, %c0_54, %c0_55] : memref<1x16x16xf32, #tpu.memory_space<vmem>>, vector<1x16x16xf32>
    %78 = vector.shape_cast %77 : vector<1x16x16xf32> to vector<16x16xf32>
    %79 = vector.shape_cast %75 : vector<16x16xf32> to vector<1x16x16xf32>
    tpu.vector_store %arg4[%76, %c0_54, %c0_55], %79 {strides = array<i32>} : memref<1x16x16xf32, #tpu.memory_space<vmem>>, vector<1x16x16xf32>,
    %c1_i32 = arith.constant 1 : i32
    return
  }
  func.func @transform_0(%arg0: i32) -> (i32, i32, i32) {
    %c0_i32 = arith.constant 0 : i32
    %c0_i32_0 = arith.constant 0 : i32
    %c0_i32_1 = arith.constant 0 : i32
    return %arg0, %c0_i32, %c0_i32_0 : i32, i32, i32
  }
  func.func @transform_1(%arg0: i32) -> (i32, i32, i32) {
    %c0_i32 = arith.constant 0 : i32
    %c0_i32_0 = arith.constant 0 : i32
    %c0_i32_1 = arith.constant 0 : i32
    %c0_i32_2 = arith.constant 0 : i32
    return %c0_i32, %c0_i32_0, %c0_i32_1 : i32, i32, i32
  }
  func.func @transform_2(%arg0: i32) -> (i32, i32) {
    %c0_i32 = arith.constant 0 : i32
    %c0_i32_0 = arith.constant 0 : i32
    %c0_i32_1 = arith.constant 0 : i32
    return %c0_i32, %c0_i32_0 : i32, i32
  }
  func.func @transform_3(%arg0: i32) -> (i32, i32, i32) {
    %c0_i32 = arith.constant 0 : i32
    %c0_i32_0 = arith.constant 0 : i32
    %c0_i32_1 = arith.constant 0 : i32
    return %arg0, %c0_i32, %c0_i32_0 : i32, i32, i32
  }
}

</mosaic_0001>

<llo_original>
// kernel: tpu_custom_call.1
$region0: #{tpu_custom_call.1}
  #allocation0 [shape = 'u32[]', space=smem, size = 0x4, offset = 0x4, fixed_abs, tag = 'smem constant byte address 0x4 - core index']
  #allocation1 [shape = 'u32[72,128]{1,0:T(1,128)}', space=vmem, size = 0x9000, scoped, tag = 'internal scratch']
  #allocation2 [shape = 'bf16[1,8,28]{2,1,0:T(8,128)(2,1)}', space=vmem, size = 0x800, scoped, tag = 'scratch operand']
  %s0 = inlined_call_operand.vmem [shape: f32[2,8,16], index: 0, kind: input, shape index: {}]
  %s1 = inlined_call_operand.vmem [shape: bf16[13,16,8], index: 1, kind: input, shape index: {}]
  %s2 = inlined_call_operand.vmem [shape: f32[16,1], index: 2, kind: input, shape index: {}]
  %s3 = inlined_call_operand.hbm [shape: f32[2,16,16], index: 3, kind: output, shape index: {}]
  %s4 = sld [smem:[#allocation0]]
  $region45: #{tpu_custom_call.1} parent=0
    _
  %s6 = ssub.s32 1, %s4
  %s7 = scalar_select 0, %s6, %s4
  $region1: #{tpu_custom_call.1} parent=0
    #allocation3 [shape = 'u8[16384]{0}', space=vmem, size = 0x4000, scoped, tag = 'output window, operand 0']
    #allocation4 [shape = 's32[2]{0}', space=sflag, size = 0x8, scoped, tag = 'scoped memory for tpu_custom_call.1']
    %8 = vsyncpa [#allocation4], 0
    %s9 = scalar_lea.sflag [#allocation4], 1
    %10 = vsyncpa %s9, 0
    loop: start=0, step=1, limit=4
    $region2: #{tpu_custom_call.1} parent=1 // loop_pre_header
      _
    $region3: #{tpu_custom_call.1} parent=1 // loop_header
      %s12 = sphi 0, %s16
      %p13 = scmp.ge.s32.totalorder %s12, 4
      %s22 = sphi 0, %s24
      %s25 = sphi 0, %s22
      %s26 = sphi 0, %s25
      %s42 = sphi 0, %s26
      %s46 = sphi 0, %s46
      %s48 = sphi 0, %s46
      %s49 = sphi 0, %s48
      %s63 = sphi 0, %s49
      %s67 = sphi 0, %s67
      %s69 = sphi 0, %s67
      %s70 = sphi 0, %s69
      %s84 = sphi 0, %s70
      %s90 = sphi 0, %s92
      %s93 = sphi 0, %s90
      %s94 = sphi 0, %s93
      %s110 = sphi 0, %s94
    $region4: #{tpu_custom_call.1} parent=1 // loop_header_branch
      %15 = sbr.rel (%p13) target = $region8
    $region5: #{tpu_custom_call.1} parent=1 // loop_body
      %s17 = ssub.s32 %s12, 1
      %s18 = ssub.s32 %s12, 2
      %s19 = sadd.s32 %s12, 1
      %s20 = ssub.s32 %s12, %s19
      %p21 = scmp.eq.s32.totalorder %s20, 0
      %s23 = sadd.s32 %s22, 1
      %s24 = scalar_select %p21, %s22, %s23
      %p27 = pneg %p21
      %p28 = scmp.eq.s32.totalorder %s12, 1
      %p29 = por %p27, %p28
      %p30 = scmp.ne.s32.totalorder %s22, %s25
      %p31 = scmp.eq.s32.totalorder %s12, 0
      %p32 = por %p30, %p31
      %p33 = scmp.ne.s32.totalorder %s22, %s25
      %p34 = scmp.eq.s32.totalorder %s17, 1
      %p35 = por %p33, %p34
      %p36 = scmp.ne.s32.totalorder %s25, %s26
      %p37 = scmp.eq.s32.totalorder %s17, 0
      %p38 = por %p36, %p37
      %p39 = scmp.ne.s32.totalorder %s25, %s26
      %p40 = scmp.eq.s32.totalorder %s18, 1
      %p41 = por %p39, %p40
      %p43 = scmp.ne.s32.totalorder %s26, %s42
      %p44 = scmp.eq.s32.totalorder %s18, 0
      %p45 = por %p43, %p44
      %s47 = sadd.s32 %s46, 1
      %p50 = scmp.eq.s32.totalorder %s12, 1
      %p51 = scmp.ne.s32.totalorder %s46, %s48
      %p52 = scmp.eq.s32.totalorder %s12, 0
      %p53 = por %p51, %p52
      %p54 = scmp.ne.s32.totalorder %s46, %s48
      %p55 = scmp.eq.s32.totalorder %s17, 1
      %p56 = por %p54, %p55
      %p57 = scmp.ne.s32.totalorder %s48, %s49
      %p58 = scmp.eq.s32.totalorder %s17, 0
      %p59 = por %p57, %p58
      %p60 = scmp.ne.s32.totalorder %s48, %s49
      %p61 = scmp.eq.s32.totalorder %s18, 1
      %p62 = por %p60, %p61
      %p64 = scmp.ne.s32.totalorder %s49, %s63
      %p65 = scmp.eq.s32.totalorder %s18, 0
      %p66 = por %p64, %p65
      %s68 = sadd.s32 %s67, 1
      %p71 = scmp.eq.s32.totalorder %s12, 1
      %p72 = scmp.ne.s32.totalorder %s67, %s69
      %p73 = scmp.eq.s32.totalorder %s12, 0
      %p74 = por %p72, %p73
      %p75 = scmp.ne.s32.totalorder %s67, %s69
      %p76 = scmp.eq.s32.totalorder %s17, 1
      %p77 = por %p75, %p76
      %p78 = scmp.ne.s32.totalorder %s69, %s70
      %p79 = scmp.eq.s32.totalorder %s17, 0
      %p80 = por %p78, %p79
      %p81 = scmp.ne.s32.totalorder %s69, %s70
      %p82 = scmp.eq.s32.totalorder %s18, 1
      %p83 = por %p81, %p82
      %p85 = scmp.ne.s32.totalorder %s70, %s84
      %p86 = scmp.eq.s32.totalorder %s18, 0
      %p87 = por %p85, %p86
      %s88 = ssub.s32 %s12, %s19
      %p89 = scmp.eq.s32.totalorder %s88, 0
      %s91 = sadd.s32 %s90, 1
      %s92 = scalar_select %p89, %s90, %s91
      %p95 = pneg %p89
      %p96 = scmp.eq.s32.totalorder %s12, 1
      %p97 = por %p95, %p96
      %p98 = scmp.ne.s32.totalorder %s90, %s93
      %p99 = scmp.eq.s32.totalorder %s12, 0
      %p100 = por %p98, %p99
      %p101 = scmp.ne.s32.totalorder %s90, %s93
      %p102 = scmp.eq.s32.totalorder %s17, 1
      %p103 = por %p101, %p102
      %p104 = scmp.ne.s32.totalorder %s93, %s94
      %p105 = scmp.eq.s32.totalorder %s17, 0
      %p106 = por %p104, %p105
      %p107 = scmp.ne.s32.totalorder %s93, %s94
      %p108 = scmp.eq.s32.totalorder %s18, 1
      %p109 = por %p107, %p108
      %p111 = scmp.ne.s32.totalorder %s94, %s110
      %p112 = scmp.eq.s32.totalorder %s18, 0
      %p113 = por %p111, %p112
      %p114 = scmp.le.s32.totalorder 1, %s12
      %p115 = scmp.lt.s32.totalorder %s12, 3
      %p116 = pnand %p114, %p115
      %p117 = pneg %p116
      // Predicated region
      $region9: #{tpu_custom_call.1} parent=5 // pred_check
        _
      $region10: #{tpu_custom_call.1} parent=5 // pred_check_branch
        %119 = sbr.rel (%p116) target = $region12
      $region11: #{tpu_custom_call.1} parent=5 // pred_region
        %s120 = ssub.s32 %s12, 1
        // Predicated region
        $region13: #{tpu_custom_call.1} parent=11 // pred_check
          %p121 = pneg %p59
        $region14: #{tpu_custom_call.1} parent=11 // pred_check_branch
          %123 = sbr.rel (%p121) target = $region16
        $region15: #{tpu_custom_call.1} parent=11 // pred_region
          _
        $region16: #{tpu_custom_call.1} parent=11 // pred_fallthru
          _
        // Predicated region
        $region17: #{tpu_custom_call.1} parent=11 // pred_check
          %p124 = pneg %p80
        $region18: #{tpu_custom_call.1} parent=11 // pred_check_branch
          %126 = sbr.rel (%p124) target = $region20
        $region19: #{tpu_custom_call.1} parent=11 // pred_region
          _
        $region20: #{tpu_custom_call.1} parent=11 // pred_fallthru
          _
      $region12: #{tpu_custom_call.1} parent=5 // pred_fallthru
        _
      %p127 = scmp.lt.s32.totalorder %s12, 2
      // Predicated region
      $region21: #{tpu_custom_call.1} parent=5 // pred_check
        %p128 = pneg %p127
      $region22: #{tpu_custom_call.1} parent=5 // pred_check_branch
        %130 = sbr.rel (%p128) target = $region24
      $region23: #{tpu_custom_call.1} parent=5 // pred_region
        // Predicated region
        $region25: #{tpu_custom_call.1} parent=23 // pred_check
          %p131 = pneg %p32
        $region26: #{tpu_custom_call.1} parent=23 // pred_check_branch
          %133 = sbr.rel (%p131) target = $region28
        $region27: #{tpu_custom_call.1} parent=23 // pred_region
          %p134 = scmp.lt.s32.totalorder %s12, 1
          %s135 = scalar_select %p134, %s12, 1
          %s136 = smul.addr %s135, 8
          %s137 = scalar_lea.vmem %s0, %s136
        $region28: #{tpu_custom_call.1} parent=23 // pred_fallthru
          _
      $region24: #{tpu_custom_call.1} parent=5 // pred_fallthru
        _
      %p138 = scmp.le.s32.totalorder 1, %s12
      %p139 = scmp.lt.s32.totalorder %s12, 3
      %p140 = pnand %p138, %p139
      %p141 = pneg %p140
      // Predicated region
      $region29: #{tpu_custom_call.1} parent=5 // pred_check
        _
      $region30: #{tpu_custom_call.1} parent=5 // pred_check_branch
        %143 = sbr.rel (%p140) target = $region32
      $region31: #{tpu_custom_call.1} parent=5 // pred_region
        %s144 = ssub.s32 %s12, 1
        %p145 = scmp.lt.s32.totalorder %s17, 1
        %s146 = scalar_select %p145, %s17, 1
        %s147 = smul.addr %s146, 8
        %s148 = scalar_lea.vmem %s0, %s147
        %p149 = pneg %p38
        %p150 = pneg %p35
        %p151 = pneg %p59
        %p152 = pneg %p56
        %p153 = pneg %p80
        %p154 = pneg %p77
        %p155 = pneg %p106
        %p156 = pneg %p103
        %s157 = sand.u32 %s93, 1
        %s158 = scalar_lea.sflag [#allocation4], %s157
        %s159 = sand.u32 %s93, 1
        %s160 = smul.addr %s159, 16
        %s161 = scalar_lea.vmem [#allocation3], %s160
        %p162 = scmp.lt.s32.totalorder %s17, 1
        %s163 = scalar_select %p162, %s17, 1
        %s164 = smul.addr %s163, 8
        %s165 = scalar_lea.vmem %s0, %s164
        %vm167 = vcmask 44032
        %168 = vst.msk [vmem:[#allocation2] sm:$0xf] %vm167, 0
        %vm169 = vcmask 224432
        %170 = vst.msk [vmem:[#allocation2] sm:$0xf] %vm169, 0
        %v171 = vld [vmem:[%s165] sm:$0xff]
        %v172 = vpack.c.bf16 %v171, %v171
        %174 = vrot.lane.b32.xlu0 %v172, 6
        %v175 = vpop.permute.xlu0 %174
        %vm177 = vcmask 175152
        %178 = vst.msk [vmem:[#allocation2] sm:$0xf] %vm177, %v175
        %v179 = vld [vmem:[%s2] sm:$0xff]
        %v180 = vld [vmem:[%s2 + $0x8] sm:$0xff]
        %v181 = vld [vmem:[#allocation2] sm:$0xf]
        %v182 = vld [vmem:[%s1] sm:$0xf]
        %v183 = vld [vmem:[%s1 + $0x4] sm:$0xf]
        %s184 = scalar_lea.vmem %s1, 8
        %v185 = vld [vmem:[%s184] sm:$0xf]
        %v186 = vld [vmem:[%s184 + $0x4] sm:$0xf]
        %v189 = vunpack.c.l.b16 %v185
        %v190 = vunpack.c.l.b16 %v186
        %v191 = vpack.c.b16 %v190, %v189
        %v193 = vunpack.c.l.b16 %v181
        %v194 = vpack.c.b16 %v193, %v193
        %195 = vrot.lane.b32.xlu0 %v194, 127
        %v196 = vpop.permute.xlu0 %195
        %vm197 = vcmask 64512
        %v199 = vsel %vm197, %v191, 0
        %vm201 = vcmask 1043456
        %v203 = vsel %vm201, %v196, 0
        %205 = vmatpush.bf16.msra.mxu0 0
        %206 = vmatpush.bf16.msra.mxu0 0
        %207 = vmatpush.bf16.msra.mxu0 0
        %208 = vmatpush.bf16.msra.mxu0 0
        %209 = vmatpush.bf16.msra.mxu0 0
        %210 = vmatpush.bf16.msra.mxu0 0
        %211 = vmatpush.bf16.msra.mxu0 0
        %212 = vmatpush.bf16.msra.mxu0 %v203
        %213 = vmatmul.bf16.gmra.mxu0 %v199
        %v214 = vpop.f32.mrf.mxu0
        %v215 = vadd.f32 0.0, %v214
        %v216 = vpop.f32.mrf.mxu0
        %v217 = vadd.f32 0.0, %v216
        %218 = vdwg.mxu0
        %v221 = vunpack.c.l.b16 %v182
        %v222 = vunpack.c.l.b16 %v183
        %v223 = vpack.c.b16 %v222, %v221
        %v225 = vsel %vm197, %v223, 0
        %v228 = vsel %vm201, %v181, 0
        %230 = vmatpush.bf16.msra.mxu0 0
        %231 = vmatpush.bf16.msra.mxu0 0
        %232 = vmatpush.bf16.msra.mxu0 0
        %233 = vmatpush.bf16.msra.mxu0 0
        %234 = vmatpush.bf16.msra.mxu0 0
        %235 = vmatpush.bf16.msra.mxu0 0
        %236 = vmatpush.bf16.msra.mxu0 0
        %237 = vmatpush.bf16.msra.mxu0 %v228
        %238 = vmatmul.bf16.gmra.mxu0 %v225
        %v239 = vpop.f32.mrf.mxu0
        %v240 = vadd.f32 %v215, %v239
        %v241 = vpop.f32.mrf.mxu0
        %v242 = vadd.f32 %v217, %v241
        %243 = vdwg.mxu0
        %s244 = scalar_lea.vmem %s1, 16
        %v245 = vld [vmem:[%s244] sm:$0xf]
        %v246 = vld [vmem:[%s244 + $0x4] sm:$0xf]
        %v249 = vunpack.c.l.b16 %v245
        %v250 = vunpack.c.l.b16 %v246
        %v251 = vpack.c.b16 %v250, %v249
        %252 = vrot.lane.b32.xlu0 %v194, 126
        %v253 = vpop.permute.xlu0 %252
        %v255 = vsel %vm197, %v251, 0
        %v258 = vsel %vm201, %v253, 0
        %260 = vmatpush.bf16.msra.mxu0 0
        %261 = vmatpush.bf16.msra.mxu0 0
        %262 = vmatpush.bf16.msra.mxu0 0
        %263 = vmatpush.bf16.msra.mxu0 0
        %264 = vmatpush.bf16.msra.mxu0 0
        %265 = vmatpush.bf16.msra.mxu0 0
        %266 = vmatpush.bf16.msra.mxu0 0
        %267 = vmatpush.bf16.msra.mxu0 %v258
        %268 = vmatmul.bf16.gmra.mxu0 %v255
        %v269 = vpop.f32.mrf.mxu0
        %v270 = vadd.f32 0.0, %v269
        %v271 = vpop.f32.mrf.mxu0
        %v272 = vadd.f32 0.0, %v271
        %273 = vdwg.mxu0
        %v274 = vadd.f32 %v240, %v270
        %v275 = vadd.f32 %v242, %v272
        %s276 = scalar_lea.vmem %s1, 24
        %v277 = vld [vmem:[%s276] sm:$0xf]
        %v278 = vld [vmem:[%s276 + $0x4] sm:$0xf]
        %v281 = vunpack.c.l.b16 %v277
        %v282 = vunpack.c.l.b16 %v278
        %v283 = vpack.c.b16 %v282, %v281
        %284 = vrot.lane.b32.xlu0 %v194, 125
        %v285 = vpop.permute.xlu0 %284
        %v287 = vsel %vm197, %v283, 0
        %v290 = vsel %vm201, %v285, 0
        %292 = vmatpush.bf16.msra.mxu0 0
        %293 = vmatpush.bf16.msra.mxu0 0
        %294 = vmatpush.bf16.msra.mxu0 0
        %295 = vmatpush.bf16.msra.mxu0 0
        %296 = vmatpush.bf16.msra.mxu0 0
        %297 = vmatpush.bf16.msra.mxu0 0
        %298 = vmatpush.bf16.msra.mxu0 0
        %299 = vmatpush.bf16.msra.mxu0 %v290
        %300 = vmatmul.bf16.gmra.mxu0 %v287
        %v301 = vpop.f32.mrf.mxu0
        %v302 = vadd.f32 0.0, %v301
        %v303 = vpop.f32.mrf.mxu0
        %v304 = vadd.f32 0.0, %v303
        %305 = vdwg.mxu0
        %v306 = vadd.f32 %v274, %v302
        %v307 = vadd.f32 %v275, %v304
        %s308 = scalar_lea.vmem %s1, 32
        %v309 = vld [vmem:[%s308] sm:$0xf]
        %v310 = vld [vmem:[%s308 + $0x4] sm:$0xf]
        %v313 = vunpack.c.l.b16 %v309
        %v314 = vunpack.c.l.b16 %v310
        %v315 = vpack.c.b16 %v314, %v313
        %316 = vrot.lane.b32.xlu0 %v194, 124
        %v317 = vpop.permute.xlu0 %316
        %v319 = vsel %vm197, %v315, 0
        %v322 = vsel %vm201, %v317, 0
        %324 = vmatpush.bf16.msra.mxu0 0
        %325 = vmatpush.bf16.msra.mxu0 0
        %326 = vmatpush.bf16.msra.mxu0 0
        %327 = vmatpush.bf16.msra.mxu0 0
        %328 = vmatpush.bf16.msra.mxu0 0
        %329 = vmatpush.bf16.msra.mxu0 0
        %330 = vmatpush.bf16.msra.mxu0 0
        %331 = vmatpush.bf16.msra.mxu0 %v322
        %332 = vmatmul.bf16.gmra.mxu0 %v319
        %v333 = vpop.f32.mrf.mxu0
        %v334 = vadd.f32 0.0, %v333
        %v335 = vpop.f32.mrf.mxu0
        %v336 = vadd.f32 0.0, %v335
        %337 = vdwg.mxu0
        %v338 = vadd.f32 %v306, %v334
        %v339 = vadd.f32 %v307, %v336
        %s340 = scalar_lea.vmem %s1, 40
        %v341 = vld [vmem:[%s340] sm:$0xf]
        %v342 = vld [vmem:[%s340 + $0x4] sm:$0xf]
        %v345 = vunpack.c.l.b16 %v341
        %v346 = vunpack.c.l.b16 %v342
        %v347 = vpack.c.b16 %v346, %v345
        %348 = vrot.lane.b32.xlu0 %v194, 123
        %v349 = vpop.permute.xlu0 %348
        %v351 = vsel %vm197, %v347, 0
        %v354 = vsel %vm201, %v349, 0
        %356 = vmatpush.bf16.msra.mxu0 0
        %357 = vmatpush.bf16.msra.mxu0 0
        %358 = vmatpush.bf16.msra.mxu0 0
        %359 = vmatpush.bf16.msra.mxu0 0
        %360 = vmatpush.bf16.msra.mxu0 0
        %361 = vmatpush.bf16.msra.mxu0 0
        %362 = vmatpush.bf16.msra.mxu0 0
        %363 = vmatpush.bf16.msra.mxu0 %v354
        %364 = vmatmul.bf16.gmra.mxu0 %v351
        %v365 = vpop.f32.mrf.mxu0
        %v366 = vadd.f32 0.0, %v365
        %v367 = vpop.f32.mrf.mxu0
        %v368 = vadd.f32 0.0, %v367
        %369 = vdwg.mxu0
        %v370 = vadd.f32 %v338, %v366
        %v371 = vadd.f32 %v339, %v368
        %s372 = scalar_lea.vmem %s1, 48
        %v373 = vld [vmem:[%s372] sm:$0xf]
        %v374 = vld [vmem:[%s372 + $0x4] sm:$0xf]
        %v377 = vunpack.c.l.b16 %v373
        %v378 = vunpack.c.l.b16 %v374
        %v379 = vpack.c.b16 %v378, %v377
        %380 = vrot.lane.b32.xlu0 %v194, 122
        %v381 = vpop.permute.xlu0 %380
        %v383 = vsel %vm197, %v379, 0
        %v386 = vsel %vm201, %v381, 0
        %388 = vmatpush.bf16.msra.mxu0 0
        %389 = vmatpush.bf16.msra.mxu0 0
        %390 = vmatpush.bf16.msra.mxu0 0
        %391 = vmatpush.bf16.msra.mxu0 0
        %392 = vmatpush.bf16.msra.mxu0 0
        %393 = vmatpush.bf16.msra.mxu0 0
        %394 = vmatpush.bf16.msra.mxu0 0
        %395 = vmatpush.bf16.msra.mxu0 %v386
        %396 = vmatmul.bf16.gmra.mxu0 %v383
        %v397 = vpop.f32.mrf.mxu0
        %v398 = vadd.f32 0.0, %v397
        %v399 = vpop.f32.mrf.mxu0
        %v400 = vadd.f32 0.0, %v399
        %401 = vdwg.mxu0
        %v402 = vadd.f32 %v370, %v398
        %v403 = vadd.f32 %v371, %v400
        %s404 = scalar_lea.vmem %s1, 56
        %v405 = vld [vmem:[%s404] sm:$0xf]
        %v406 = vld [vmem:[%s404 + $0x4] sm:$0xf]
        %v409 = vunpack.c.l.b16 %v405
        %v410 = vunpack.c.l.b16 %v406
        %v411 = vpack.c.b16 %v410, %v409
        %412 = vrot.lane.b32.xlu0 %v194, 121
        %v413 = vpop.permute.xlu0 %412
        %v415 = vsel %vm197, %v411, 0
        %v418 = vsel %vm201, %v413, 0
        %420 = vmatpush.bf16.msra.mxu0 0
        %421 = vmatpush.bf16.msra.mxu0 0
        %422 = vmatpush.bf16.msra.mxu0 0
        %423 = vmatpush.bf16.msra.mxu0 0
        %424 = vmatpush.bf16.msra.mxu0 0
        %425 = vmatpush.bf16.msra.mxu0 0
        %426 = vmatpush.bf16.msra.mxu0 0
        %427 = vmatpush.bf16.msra.mxu0 %v418
        %428 = vmatmul.bf16.gmra.mxu0 %v415
        %v429 = vpop.f32.mrf.mxu0
        %v430 = vadd.f32 0.0, %v429
        %v431 = vpop.f32.mrf.mxu0
        %v432 = vadd.f32 0.0, %v431
        %433 = vdwg.mxu0
        %v434 = vadd.f32 %v402, %v430
        %v435 = vadd.f32 %v403, %v432
        %s436 = scalar_lea.vmem %s1, 64
        %v437 = vld [vmem:[%s436] sm:$0xf]
        %v438 = vld [vmem:[%s436 + $0x4] sm:$0xf]
        %v441 = vunpack.c.l.b16 %v437
        %v442 = vunpack.c.l.b16 %v438
        %v443 = vpack.c.b16 %v442, %v441
        %444 = vrot.lane.b32.xlu0 %v194, 120
        %v445 = vpop.permute.xlu0 %444
        %v447 = vsel %vm197, %v443, 0
        %v450 = vsel %vm201, %v445, 0
        %452 = vmatpush.bf16.msra.mxu0 0
        %453 = vmatpush.bf16.msra.mxu0 0
        %454 = vmatpush.bf16.msra.mxu0 0
        %455 = vmatpush.bf16.msra.mxu0 0
        %456 = vmatpush.bf16.msra.mxu0 0
        %457 = vmatpush.bf16.msra.mxu0 0
        %458 = vmatpush.bf16.msra.mxu0 0
        %459 = vmatpush.bf16.msra.mxu0 %v450
        %460 = vmatmul.bf16.gmra.mxu0 %v447
        %v461 = vpop.f32.mrf.mxu0
        %v462 = vadd.f32 0.0, %v461
        %v463 = vpop.f32.mrf.mxu0
        %v464 = vadd.f32 0.0, %v463
        %465 = vdwg.mxu0
        %v466 = vadd.f32 %v434, %v462
        %v467 = vadd.f32 %v435, %v464
        %s468 = scalar_lea.vmem %s1, 72
        %v469 = vld [vmem:[%s468] sm:$0xf]
        %v470 = vld [vmem:[%s468 + $0x4] sm:$0xf]
        %v473 = vunpack.c.l.b16 %v469
        %v474 = vunpack.c.l.b16 %v470
        %v475 = vpack.c.b16 %v474, %v473
        %476 = vrot.lane.b32.xlu0 %v194, 119
        %v477 = vpop.permute.xlu0 %476
        %v479 = vsel %vm197, %v475, 0
        %v482 = vsel %vm201, %v477, 0
        %484 = vmatpush.bf16.msra.mxu0 0
        %485 = vmatpush.bf16.msra.mxu0 0
        %486 = vmatpush.bf16.msra.mxu0 0
        %487 = vmatpush.bf16.msra.mxu0 0
        %488 = vmatpush.bf16.msra.mxu0 0
        %489 = vmatpush.bf16.msra.mxu0 0
        %490 = vmatpush.bf16.msra.mxu0 0
        %491 = vmatpush.bf16.msra.mxu0 %v482
        %492 = vmatmul.bf16.gmra.mxu0 %v479
        %v493 = vpop.f32.mrf.mxu0
        %v494 = vadd.f32 0.0, %v493
        %v495 = vpop.f32.mrf.mxu0
        %v496 = vadd.f32 0.0, %v495
        %497 = vdwg.mxu0
        %v498 = vadd.f32 %v466, %v494
        %v499 = vadd.f32 %v467, %v496
        %s500 = scalar_lea.vmem %s1, 80
        %v501 = vld [vmem:[%s500] sm:$0xf]
        %v502 = vld [vmem:[%s500 + $0x4] sm:$0xf]
        %v505 = vunpack.c.l.b16 %v501
        %v506 = vunpack.c.l.b16 %v502
        %v507 = vpack.c.b16 %v506, %v505
        %508 = vrot.lane.b32.xlu0 %v194, 118
        %v509 = vpop.permute.xlu0 %508
        %v511 = vsel %vm197, %v507, 0
        %v514 = vsel %vm201, %v509, 0
        %516 = vmatpush.bf16.msra.mxu0 0
        %517 = vmatpush.bf16.msra.mxu0 0
        %518 = vmatpush.bf16.msra.mxu0 0
        %519 = vmatpush.bf16.msra.mxu0 0
        %520 = vmatpush.bf16.msra.mxu0 0
        %521 = vmatpush.bf16.msra.mxu0 0
        %522 = vmatpush.bf16.msra.mxu0 0
        %523 = vmatpush.bf16.msra.mxu0 %v514
        %524 = vmatmul.bf16.gmra.mxu0 %v511
        %v525 = vpop.f32.mrf.mxu0
        %v526 = vadd.f32 0.0, %v525
        %v527 = vpop.f32.mrf.mxu0
        %v528 = vadd.f32 0.0, %v527
        %529 = vdwg.mxu0
        %v530 = vadd.f32 %v498, %v526
        %v531 = vadd.f32 %v499, %v528
        %s532 = scalar_lea.vmem %s1, 88
        %v533 = vld [vmem:[%s532] sm:$0xf]
        %v534 = vld [vmem:[%s532 + $0x4] sm:$0xf]
        %v537 = vunpack.c.l.b16 %v533
        %v538 = vunpack.c.l.b16 %v534
        %v539 = vpack.c.b16 %v538, %v537
        %540 = vrot.lane.b32.xlu0 %v194, 117
        %v541 = vpop.permute.xlu0 %540
        %v543 = vsel %vm197, %v539, 0
        %v546 = vsel %vm201, %v541, 0
        %548 = vmatpush.bf16.msra.mxu0 0
        %549 = vmatpush.bf16.msra.mxu0 0
        %550 = vmatpush.bf16.msra.mxu0 0
        %551 = vmatpush.bf16.msra.mxu0 0
        %552 = vmatpush.bf16.msra.mxu0 0
        %553 = vmatpush.bf16.msra.mxu0 0
        %554 = vmatpush.bf16.msra.mxu0 0
        %555 = vmatpush.bf16.msra.mxu0 %v546
        %556 = vmatmul.bf16.gmra.mxu0 %v543
        %v557 = vpop.f32.mrf.mxu0
        %v558 = vadd.f32 0.0, %v557
        %v559 = vpop.f32.mrf.mxu0
        %v560 = vadd.f32 0.0, %v559
        %561 = vdwg.mxu0
        %v562 = vadd.f32 %v530, %v558
        %v563 = vadd.f32 %v531, %v560
        %s564 = scalar_lea.vmem %s1, 96
        %v565 = vld [vmem:[%s564] sm:$0xf]
        %v566 = vld [vmem:[%s564 + $0x4] sm:$0xf]
        %v569 = vunpack.c.l.b16 %v565
        %v570 = vunpack.c.l.b16 %v566
        %v571 = vpack.c.b16 %v570, %v569
        %572 = vrot.lane.b32.xlu0 %v194, 116
        %v573 = vpop.permute.xlu0 %572
        %v575 = vsel %vm197, %v571, 0
        %v578 = vsel %vm201, %v573, 0
        %580 = vmatpush.bf16.msra.mxu0 0
        %581 = vmatpush.bf16.msra.mxu0 0
        %582 = vmatpush.bf16.msra.mxu0 0
        %583 = vmatpush.bf16.msra.mxu0 0
        %584 = vmatpush.bf16.msra.mxu0 0
        %585 = vmatpush.bf16.msra.mxu0 0
        %586 = vmatpush.bf16.msra.mxu0 0
        %587 = vmatpush.bf16.msra.mxu0 %v578
        %588 = vmatmul.bf16.gmra.mxu0 %v575
        %v589 = vpop.f32.mrf.mxu0
        %v590 = vadd.f32 0.0, %v589
        %v591 = vpop.f32.mrf.mxu0
        %v592 = vadd.f32 0.0, %v591
        %593 = vdwg.mxu0
        %v594 = vadd.f32 %v562, %v590
        %v595 = vadd.f32 %v563, %v592
        %597 = vset.pattern.permute.xlu0 0
        %598 = vperm.xlu0 %597, %v179
        %v599 = vpop.permute.xlu0 %598
        %602 = vset.pattern.permute.xlu0 0
        %603 = vperm.xlu0 %602, %v180
        %v604 = vpop.permute.xlu0 %603
        %v606 = vadd.f32 %v594, %v599
        %v607 = vadd.f32 %v595, %v604
        %vm608 = vcmask 130048
        %609 = vst.msk [vmem:[%s161] sm:$0xff] %vm608, %v606
        %610 = vst.msk [vmem:[%s161 + $0x8] sm:$0xff] %vm608, %v607
        %s611 = sand.u32 %s93, 1
        %s612 = scalar_lea.sflag [#allocation4], %s611
        %s613 = sand.u32 %s93, 1
        %s614 = smul.addr %s613, 16
        %s615 = scalar_lea.vmem [#allocation3], %s614
        // Predicated region
        $region33: #{tpu_custom_call.1} parent=31 // pred_check
          %p616 = pneg %p103
        $region34: #{tpu_custom_call.1} parent=31 // pred_check_branch
          %618 = sbr.rel (%p616) target = $region36
        $region35: #{tpu_custom_call.1} parent=31 // pred_region
          %620 = vsyncadd %s612, 0
          %s621 = smul.addr %s17, 2
          %s622 = smul.addr %s621, 8
          %s623 = scalar_lea.hbm %s3, %s622
          %s624 = sshll.u32 %s615, 4
          %s625 = int_to_ptr.vmem [resolvable:$true] %s624
          %s626 = sshll.u32 %s623, 4
          %s627 = int_to_ptr.hbm [resolvable:$true] %s626
          %632 = dma.vmem_to_hbm [thread:$0]  %s625, 256, %s627, %s612, 128, 128, 8
        $region36: #{tpu_custom_call.1} parent=31 // pred_fallthru
          _
      $region32: #{tpu_custom_call.1} parent=5 // pred_fallthru
        _
      %p633 = scmp.le.s32.totalorder 2, %s12
      // Predicated region
      $region37: #{tpu_custom_call.1} parent=5 // pred_check
        %p634 = pneg %p633
      $region38: #{tpu_custom_call.1} parent=5 // pred_check_branch
        %636 = sbr.rel (%p634) target = $region40
      $region39: #{tpu_custom_call.1} parent=5 // pred_region
        %s637 = ssub.s32 %s12, 2
        // Predicated region
        $region41: #{tpu_custom_call.1} parent=39 // pred_check
          %p638 = pneg %p109
        $region42: #{tpu_custom_call.1} parent=39 // pred_check_branch
          %640 = sbr.rel (%p638) target = $region44
        $region43: #{tpu_custom_call.1} parent=39 // pred_region
          %s641 = sand.u32 %s94, 1
          %s642 = scalar_lea.sflag [#allocation4], %s641
          %s643 = sand.u32 %s94, 1
          %s644 = smul.addr %s643, 16
          %s645 = scalar_lea.vmem [#allocation3], %s644
          %647 = dma.done %s642, 256
        $region44: #{tpu_custom_call.1} parent=39 // pred_fallthru
          _
      $region40: #{tpu_custom_call.1} parent=5 // pred_fallthru
        _
    $region6: #{tpu_custom_call.1} parent=1 // loop_footer
      %s16 = sadd.s32 1, %s12
    $region7: #{tpu_custom_call.1} parent=1 // loop_footer_branch
      %11 = sbr.rel target = $region3
    $region8: #{tpu_custom_call.1} parent=1 // loop_exit
      _
    %648 = vsyncpa [#allocation4], 1
    %s649 = scalar_lea.sflag [#allocation4], 1
    %650 = vsyncpa %s649, 1

</llo_original>
